<compile_context>
chip_gen: v7x
topology: tpu7x:2x2x1
jax: 0.10.0
libtpu: 0.0.40
codegen_flags: <defaults>
</compile_context>

<pallas_src>
import functools

import jax
import jax.numpy as jnp
from jax.experimental import pallas as pl
from jax.experimental.pallas import tpu as pltpu


def _round_up(x, m):
    return ((x + m - 1) // m) * m


def _sublane_multiple(*dtypes):
    """Second-to-last-dim tiling multiple for a non-full batch block."""
    size = min(jnp.dtype(d).itemsize for d in dtypes)
    return {4: 8, 2: 16, 1: 32}.get(size, 8)


def _fused_kernel(scal_ref, state_ref, act_ref, gws_ref, r_ref, g_ref, o_ref, *,
                  normalize: bool, eps: float, inv_d: float):
    """Fused last-state LayerNorm + Linear(D, 1), no materialized concat.

    scal_ref : (2,) f32 in SMEM  -> [sum(gamma*w), beta·w + bias]
    state_ref: (TB, S)           -> state tile
    act_ref  : (TB, A*Da)        -> flattened action tile (dense DMA)
    gws_ref  : (1, S)            -> gamma*w (state half)   [w_s if !normalize]
    r_ref    : (A*Da, A)         -> block-diag ones  (segment row-sum matrix)
    g_ref    : (A*Da, A)         -> block-diag gamma*w_a   [w_a if !normalize]
    o_ref    : (TB, A)           -> Q-values
    """
    st = state_ref[...].astype(jnp.float32)                 # (TB, S)
    ac = act_ref[...].astype(jnp.float32)                   # (TB, A*Da)
    gw_s = gws_ref[...].astype(jnp.float32)                 # (1, S)
    c = scal_ref[1]                                         # beta·w + bias (or bias)

    # State-half contributions: 3 row reduces per step, independent of A.
    dot_s = jnp.sum(st * gw_s, axis=-1, keepdims=True)      # (TB, 1)
    # Action-half dot as a tiny MXU matmul against the block-diagonal G.
    dot_a = jnp.dot(ac, g_ref[...],
                    preferred_element_type=jnp.float32)     # (TB, A)

    if normalize:
        s_gw = scal_ref[0]                                  # sum(gamma*w) scalar
        r = r_ref[...]
        sum_s = jnp.sum(st, axis=-1, keepdims=True)         # (TB, 1)
        ssq_s = jnp.sum(st * st, axis=-1, keepdims=True)    # (TB, 1)
        sum_a = jnp.dot(ac, r, preferred_element_type=jnp.float32)       # (TB, A)
        ssq_a = jnp.dot(ac * ac, r, preferred_element_type=jnp.float32)  # (TB, A)

        # LayerNorm over the virtual concatenation [state ; action].
        mean = (sum_s + sum_a) * inv_d                      # (TB, A)
        var = jnp.maximum((ssq_s + ssq_a) * inv_d - mean * mean, 0.0)
        inv_std = jax.lax.rsqrt(var + eps)                  # EUP slot
        # ((x - mean) * inv_std * gamma + beta) @ w + bias, rearranged:
        q = inv_std * (dot_s + dot_a - mean * s_gw) + c
    else:
        q = dot_s + dot_a + c

    o_ref[...] = q.astype(o_ref.dtype)


def _pick_batch_tile(b, a, s, ada, sub):
    """Batch rows per grid step.

    ~4 MiB of (lane-padded) payload per step so the fixed ~0.35 us per-step
    pipeline overhead is well amortized; double-buffered this is ~8 MiB, under
    v5e's 16 MiB scoped-VMEM default and v7x's 64 MiB physical VMEM.  Capped so
    the grid has >= 2 steps whenever b allows (keeps both v7x TensorCores busy).
    """
    lane = 128
    bytes_per_row = 4 * (_round_up(s, lane) + _round_up(max(ada, 1), lane)
                         + _round_up(a, lane))
    budget = 4 * 1024 * 1024
    tb = max(sub, budget // max(bytes_per_row, 1))
    if b > sub:
        half = max(sub, (pl.cdiv(b, 2) // sub) * sub)
        tb = min(tb, half)
    tb = min(tb, b)
    if tb < b:
        tb = max(sub, (tb // sub) * sub)
    return int(tb)


def _run_kernel(state, act, gamma, beta, w, bias, *, normalize: bool, eps: float,
                block_batch=None):
    b, s = state.shape
    _, a, da = act.shape
    d = s + da
    ada = a * da

    # Dense, contiguous reshape: (B, A, Da) -> (B, A*Da). No data movement.
    act_flat = act.reshape(b, ada)

    sub = _sublane_multiple(state.dtype, act.dtype)
    if block_batch is not None:
        tb = min(int(block_batch), b)
        if tb < b:
            tb = max(sub, (tb // sub) * sub)
    else:
        tb = _pick_batch_tile(b, a, s, ada, sub)
    grid = (pl.cdiv(b, tb),)

    # ---- Hoisted, batch-independent coefficient math (done once, not per step)
    w_s = w[0, :s].astype(jnp.float32)
    w_a = w[0, s:].astype(jnp.float32)
    # R: segment row-sum matrix, R[i*Da + j, i] = 1
    eye_rep = jnp.repeat(jnp.eye(a, dtype=jnp.float32), da, axis=0)     # (A*Da, A)
    if normalize:
        gw_s = (gamma[:s].astype(jnp.float32) * w_s).reshape(1, s)
        gw_a = gamma[s:].astype(jnp.float32) * w_a                      # (Da,)
        s_gw = jnp.sum(gw_s) + jnp.sum(gw_a)
        c = (jnp.sum(beta[:s].astype(jnp.float32) * w_s)
             + jnp.sum(beta[s:].astype(jnp.float32) * w_a)
             + bias.astype(jnp.float32)[0])
        g_mat = eye_rep * jnp.tile(gw_a, a)[:, None]                    # (A*Da, A)
    else:
        gw_s = w_s.reshape(1, s)
        s_gw = jnp.asarray(0.0, jnp.float32)
        c = bias.astype(jnp.float32)[0]
        g_mat = eye_rep * jnp.tile(w_a, a)[:, None]
    r_mat = eye_rep
    scal = jnp.stack([s_gw, c]).astype(jnp.float32)                     # SMEM scalars

    kernel = functools.partial(_fused_kernel, normalize=normalize,
                               eps=float(eps), inv_d=1.0 / float(d))

    return pl.pallas_call(
        kernel,
        out_shape=jax.ShapeDtypeStruct((b, a), jnp.float32),
        grid=grid,
        in_specs=[
            pl.BlockSpec(memory_space=pltpu.MemorySpace.SMEM),   # [s_gw, c] scalars
            pl.BlockSpec((tb, s), lambda i: (i, 0)),             # state tile
            pl.BlockSpec((tb, ada), lambda i: (i, 0)),           # flattened action tile
            pl.BlockSpec((1, s), lambda i: (0, 0)),              # gamma*w (state half)
            pl.BlockSpec((ada, a), lambda i: (0, 0)),            # R (block-diag ones)
            pl.BlockSpec((ada, a), lambda i: (0, 0)),            # G (block-diag gamma*w_a)
        ],
        out_specs=pl.BlockSpec((tb, a), lambda i: (i, 0)),
        compiler_params=pltpu.CompilerParams(
            # Batch tiles are independent -> shards across v7x's 2 TensorCores.
            dimension_semantics=("parallel",),
            vmem_limit_bytes=32 * 1024 * 1024),
    )(scal, state, act_flat, gw_s, r_mat, g_mat)


def init_linear_network_params(key, state_dim: int, action_dim: int):
    """Deterministic init mirroring nn.Linear / nn.LayerNorm defaults."""
    d = state_dim + action_dim
    kw, kb = jax.random.split(key)
    bound = 1.0 / jnp.sqrt(jnp.float32(d))
    return {
        # nn.Linear(d, 1): weight (1, d), bias (1,), U(-1/sqrt(d), 1/sqrt(d))
        "w": jax.random.uniform(kw, (1, d), jnp.float32, -bound, bound),
        "b": jax.random.uniform(kb, (1,), jnp.float32, -bound, bound),
        # nn.LayerNorm(d): gamma=1, beta=0
        "gamma": jnp.ones((d,), jnp.float32),
        "beta": jnp.zeros((d,), jnp.float32),
    }


def linear_network_forward(states, action_space, params, *,
                           normalize: bool = True, eps: float = 1e-5,
                           block_batch=None):
    """JAX/Pallas equivalent of LinearNetwork.forward.

    states: (B, T, S) / (T, S) / (S,) or a list of (T_i, S) arrays.
    action_space: (B, A, Da) or (A, Da), or a 3-tuple whose first element is it.
    Returns Q-values (B, A), squeezed to (A,) in the same cases as PyTorch.
    """
    if isinstance(action_space, tuple) and len(action_space) == 3:
        action_features = action_space[0]
    else:
        action_features = action_space

    if isinstance(states, (list, tuple)):
        state = jnp.stack([s[-1] for s in states])     # treated as a 3-D batch
        states_ndim = 3
    else:
        states_ndim = states.ndim
        if states_ndim == 3:
            state = states[:, -1, :]
        elif states_ndim == 2:
            state = states[-1][None, :]
            if action_features.ndim == 2:
                action_features = action_features[None, ...]
        else:
            state = states[None, :]
            if action_features.ndim == 2:
                action_features = action_features[None, ...]

    b = state.shape[0]
    a = action_features.shape[1]
    if a == 0:
        return jnp.zeros((b, 0), dtype=jnp.float32)

    q = _run_kernel(state, action_features, params["gamma"], params["beta"],
                    params["w"], params["b"], normalize=normalize, eps=eps,
                    block_batch=block_batch)

    if states_ndim == 2 and action_features.ndim == 3 and action_features.shape[0] == 1:
        q = q[0]
    elif states_ndim == 1:
        q = q[0]
    return q


def _reference_forward(states, action_features, params, *, normalize, eps=1e-5):
    """Pure-JAX reference (mirrors the PyTorch math) for validation."""
    state = states[:, -1, :]
    b = state.shape[0]
    a = action_features.shape[1]
    sa = jnp.concatenate(
        [jnp.broadcast_to(state[:, None, :], (b, a, state.shape[-1])),
         action_features], axis=2)
    if normalize:
        mean = jnp.mean(sa, axis=-1, keepdims=True)
        var = jnp.mean((sa - mean) ** 2, axis=-1, keepdims=True)
        sa = (sa - mean) / jnp.sqrt(var + eps)
        sa = sa * params["gamma"] + params["beta"]
    logits = sa @ params["w"].T + params["b"]
    return logits[..., 0]


if __name__ == "__main__":
    key = jax.random.PRNGKey(0)
    k_param, k_s1, k_a1, k_s2, k_a2, k_s3, k_a3, k_s4, k_a4 = jax.random.split(key, 9)

    state_dim, action_dim = 12, 20          # D = 32
    batch, seq, num_actions = 2, 8, 5

    params = init_linear_network_params(k_param, state_dim, action_dim)

    # Tolerances cover possible bf16 MXU rounding of the tiny in-kernel matmuls.
    TOL = dict(atol=1e-2, rtol=1e-2)

    states = jax.random.normal(k_s1, (batch, seq, state_dim), jnp.float32)
    action_features = jax.random.normal(
        k_a1, (batch, num_actions, action_dim), jnp.float32)

    q = jax.block_until_ready(
        linear_network_forward(states, action_features, params, normalize=True))
    q_ref = _reference_forward(states, action_features, params, normalize=True)
    assert q.shape == (batch, num_actions), q.shape
    assert jnp.allclose(q, q_ref, **TOL), (q, q_ref)

    # normalize=False path
    q_nonorm = jax.block_until_ready(
        linear_network_forward(states, action_features, params, normalize=False))
    q_nonorm_ref = _reference_forward(states, action_features, params,
                                      normalize=False)
    assert jnp.allclose(q_nonorm, q_nonorm_ref, **TOL)

    # Larger batch exercising a multi-step 1-D "parallel" grid (pipelined).
    b2, a2 = 48, 7
    states2 = jax.random.normal(k_s2, (b2, seq, state_dim), jnp.float32)
    actions2 = jax.random.normal(k_a2, (b2, a2, action_dim), jnp.float32)
    q2 = jax.block_until_ready(
        linear_network_forward(states2, actions2, params, normalize=True,
                               block_batch=16))
    q2_ref = _reference_forward(states2, actions2, params, normalize=True)
    assert q2.shape == (b2, a2), q2.shape
    assert jnp.allclose(q2, q2_ref, **TOL)

    # Non-divisible batch: default tile picker -> 2 grid steps + masked tail.
    b3, a3 = 13, 3
    states3 = jax.random.normal(k_s3, (b3, seq, state_dim), jnp.float32)
    actions3 = jax.random.normal(k_a3, (b3, a3, action_dim), jnp.float32)
    q3 = jax.block_until_ready(
        linear_network_forward(states3, actions3, params, normalize=True))
    q3_ref = _reference_forward(states3, actions3, params, normalize=True)
    assert q3.shape == (b3, a3), q3.shape
    assert jnp.allclose(q3, q3_ref, **TOL)

    # 2-D states / 2-D actions path (exercises the batch-of-1 squeeze).
    states4 = jax.random.normal(k_s4, (seq, state_dim), jnp.float32)
    actions4 = jax.random.normal(k_a4, (4, action_dim), jnp.float32)
    q4 = jax.block_until_ready(
        linear_network_forward(states4, actions4, params, normalize=True))
    q4_ref = _reference_forward(states4[None], actions4[None], params,
                                normalize=True)[0]
    assert q4.shape == (4,), q4.shape
    assert jnp.allclose(q4, q4_ref, **TOL)

    print("KERNEL_OK")
</pallas_src>

<mosaic_0001>
module attributes {stable_mosaic.version = 11 : i64} {
  func.func @_fused_kernel(%arg0: i32, %arg1: memref<2xf32, #tpu.memory_space<smem>>, %arg2: memref<2x12xf32, #tpu.memory_space<vmem>>, %arg3: memref<2x100xf32, #tpu.memory_space<vmem>>, %arg4: memref<1x12xf32, #tpu.memory_space<vmem>>, %arg5: memref<100x5xf32, #tpu.memory_space<vmem>>, %arg6: memref<100x5xf32, #tpu.memory_space<vmem>>, %arg7: memref<2x5xf32, #tpu.memory_space<vmem>>) attributes {dimension_semantics = [#tpu.dimension_semantics<parallel>], iteration_bounds = array<i64: 1>, scalar_prefetch = 0 : i64, scratch_operands = 0 : i64, tpu.core_type = #tpu.core_type<tc>, window_params = [{transform_indices = @transform_0, window_bounds = array<i64: 2>}, {transform_indices = @transform_1, window_bounds = array<i64: 2, 12>}, {transform_indices = @transform_2, window_bounds = array<i64: 2, 100>}, {pipeline_mode = #tpu.pipeline_mode<synchronous>, transform_indices = @transform_3, window_bounds = array<i64: 1, 12>}, {pipeline_mode = #tpu.pipeline_mode<synchronous>, transform_indices = @transform_4, window_bounds = array<i64: 100, 5>}, {pipeline_mode = #tpu.pipeline_mode<synchronous>, transform_indices = @transform_5, window_bounds = array<i64: 100, 5>}, {transform_indices = @transform_6, window_bounds = array<i64: 2, 5>}]} {
    %c0 = arith.constant 0 : index
    %c0_0 = arith.constant 0 : index
    %0 = vector.load %arg2[%c0, %c0_0] : memref<2x12xf32, #tpu.memory_space<vmem>>, vector<2x12xf32>
    %c0_1 = arith.constant 0 : index
    %c0_2 = arith.constant 0 : index
    %1 = vector.load %arg3[%c0_1, %c0_2] : memref<2x100xf32, #tpu.memory_space<vmem>>, vector<2x100xf32>
    %c0_3 = arith.constant 0 : index
    %c0_4 = arith.constant 0 : index
    %2 = vector.load %arg4[%c0_3, %c0_4] : memref<1x12xf32, #tpu.memory_space<vmem>>, vector<1x12xf32>
    %c1 = arith.constant 1 : index
    %3 = memref.load %arg1[%c1] : memref<2xf32, #tpu.memory_space<smem>>
    %4 = vector.broadcast %2 : vector<1x12xf32> to vector<2x12xf32>
    %5 = arith.mulf %0, %4 : vector<2x12xf32>
    %cst = arith.constant dense<0.000000e+00> : vector<2xf32>
    %6 = vector.multi_reduction <add>, %5, %cst [1] : vector<2x12xf32> to vector<2xf32>
    %7 = vector.shape_cast %6 : vector<2xf32> to vector<2x1xf32>
    %c0_5 = arith.constant 0 : index
    %c0_6 = arith.constant 0 : index
    %8 = vector.load %arg6[%c0_5, %c0_6] : memref<100x5xf32, #tpu.memory_space<vmem>>, vector<100x5xf32>
    %cst_7 = arith.constant dense<0.000000e+00> : vector<2x5xf32>
    %9 = tpu.matmul %1, %8, %cst_7 {dimension_numbers = #tpu.dot_dimension_numbers<[1], [0], [0], [1], [0, 0, 1, 1], [], []>} : vector<2x100xf32>, vector<100x5xf32>, vector<2x5xf32> -> vector<2x5xf32>
    %c0_8 = arith.constant 0 : index
    %10 = memref.load %arg1[%c0_8] : memref<2xf32, #tpu.memory_space<smem>>
    %c0_9 = arith.constant 0 : index
    %c0_10 = arith.constant 0 : index
    %11 = vector.load %arg5[%c0_9, %c0_10] : memref<100x5xf32, #tpu.memory_space<vmem>>, vector<100x5xf32>
    %cst_11 = arith.constant dense<0.000000e+00> : vector<2xf32>
    %12 = vector.multi_reduction <add>, %0, %cst_11 [1] : vector<2x12xf32> to vector<2xf32>
    %13 = vector.shape_cast %12 : vector<2xf32> to vector<2x1xf32>
    %14 = arith.mulf %0, %0 : vector<2x12xf32>
    %cst_12 = arith.constant dense<0.000000e+00> : vector<2xf32>
    %15 = vector.multi_reduction <add>, %14, %cst_12 [1] : vector<2x12xf32> to vector<2xf32>
    %16 = vector.shape_cast %15 : vector<2xf32> to vector<2x1xf32>
    %cst_13 = arith.constant dense<0.000000e+00> : vector<2x5xf32>
    %17 = tpu.matmul %1, %11, %cst_13 {dimension_numbers = #tpu.dot_dimension_numbers<[1], [0], [0], [1], [0, 0, 1, 1], [], []>} : vector<2x100xf32>, vector<100x5xf32>, vector<2x5xf32> -> vector<2x5xf32>
    %18 = arith.mulf %1, %1 : vector<2x100xf32>
    %cst_14 = arith.constant dense<0.000000e+00> : vector<2x5xf32>
    %19 = tpu.matmul %18, %11, %cst_14 {dimension_numbers = #tpu.dot_dimension_numbers<[1], [0], [0], [1], [0, 0, 1, 1], [], []>} : vector<2x100xf32>, vector<100x5xf32>, vector<2x5xf32> -> vector<2x5xf32>
    %20 = vector.broadcast %13 : vector<2x1xf32> to vector<2x5xf32>
    %21 = arith.addf %20, %17 : vector<2x5xf32>
    %cst_15 = arith.constant 3.125000e-02 : f32
    %22 = vector.broadcast %cst_15 : f32 to vector<2x5xf32>
    %23 = arith.mulf %21, %22 : vector<2x5xf32>
    %24 = vector.broadcast %16 : vector<2x1xf32> to vector<2x5xf32>
    %25 = arith.addf %24, %19 : vector<2x5xf32>
    %cst_16 = arith.constant 3.125000e-02 : f32
    %26 = vector.broadcast %cst_16 : f32 to vector<2x5xf32>
    %27 = arith.mulf %25, %26 : vector<2x5xf32>
    %28 = arith.mulf %23, %23 : vector<2x5xf32>
    %29 = arith.subf %27, %28 : vector<2x5xf32>
    %cst_17 = arith.constant 0.000000e+00 : f32
    %30 = vector.broadcast %cst_17 : f32 to vector<2x5xf32>
    %31 = arith.maximumf %29, %30 : vector<2x5xf32>
    %cst_18 = arith.constant 9.99999974E-6 : f32
    %32 = vector.broadcast %cst_18 : f32 to vector<2x5xf32>
    %33 = arith.addf %31, %32 : vector<2x5xf32>
    %34 = math.rsqrt %33 : vector<2x5xf32>
    %35 = vector.broadcast %7 : vector<2x1xf32> to vector<2x5xf32>
    %36 = arith.addf %35, %9 : vector<2x5xf32>
    %37 = vector.broadcast %10 : f32 to vector<2x5xf32>
    %38 = arith.mulf %23, %37 : vector<2x5xf32>
    %39 = arith.subf %36, %38 : vector<2x5xf32>
    %40 = arith.mulf %34, %39 : vector<2x5xf32>
    %41 = vector.broadcast %3 : f32 to vector<2x5xf32>
    %42 = arith.addf %40, %41 : vector<2x5xf32>
    %c0_19 = arith.constant 0 : index
    %c0_20 = arith.constant 0 : index
    %43 = vector.load %arg7[%c0_19, %c0_20] : memref<2x5xf32, #tpu.memory_space<vmem>>, vector<2x5xf32>
    tpu.vector_store %arg7[%c0_19, %c0_20], %42 {strides = array<i32>} : memref<2x5xf32, #tpu.memory_space<vmem>>, vector<2x5xf32>,
    return
  }
  func.func @transform_0(%arg0: i32) -> i32 {
    %c0_i32 = arith.constant 0 : i32
    %c0_i32_0 = arith.constant 0 : i32
    return %c0_i32 : i32
  }
  func.func @transform_1(%arg0: i32) -> (i32, i32) {
    %c0_i32 = arith.constant 0 : i32
    %c0_i32_0 = arith.constant 0 : i32
    return %arg0, %c0_i32 : i32, i32
  }
  func.func @transform_2(%arg0: i32) -> (i32, i32) {
    %c0_i32 = arith.constant 0 : i32
    %c0_i32_0 = arith.constant 0 : i32
    return %arg0, %c0_i32 : i32, i32
  }
  func.func @transform_3(%arg0: i32) -> (i32, i32) {
    %c0_i32 = arith.constant 0 : i32
    %c0_i32_0 = arith.constant 0 : i32
    %c0_i32_1 = arith.constant 0 : i32
    return %c0_i32, %c0_i32_0 : i32, i32
  }
  func.func @transform_4(%arg0: i32) -> (i32, i32) {
    %c0_i32 = arith.constant 0 : i32
    %c0_i32_0 = arith.constant 0 : i32
    %c0_i32_1 = arith.constant 0 : i32
    return %c0_i32, %c0_i32_0 : i32, i32
  }
  func.func @transform_5(%arg0: i32) -> (i32, i32) {
    %c0_i32 = arith.constant 0 : i32
    %c0_i32_0 = arith.constant 0 : i32
    %c0_i32_1 = arith.constant 0 : i32
    return %c0_i32, %c0_i32_0 : i32, i32
  }
  func.func @transform_6(%arg0: i32) -> (i32, i32) {
    %c0_i32 = arith.constant 0 : i32
    %c0_i32_0 = arith.constant 0 : i32
    return %arg0, %c0_i32 : i32, i32
  }
}

</mosaic_0001>

<llo_original>
// kernel: tpu_custom_call.1
$region0: #{tpu_custom_call.1}
  #allocation0 [shape = 'u32[]', space=smem, size = 0x4, offset = 0x4, fixed_abs, tag = 'smem constant byte address 0x4 - core index']
  #allocation1 [shape = 'u32[144,128]{1,0:T(1,128)}', space=vmem, size = 0x12000, scoped, tag = 'internal scratch']
  %s0 = inlined_call_operand.vmem [shape: f32[2], index: 0, kind: input, shape index: {}]
  %s1 = inlined_call_operand.vmem [shape: f32[2,12], index: 1, kind: input, shape index: {}]
  %s2 = inlined_call_operand.vmem [shape: f32[2,100], index: 2, kind: input, shape index: {}]
  %s3 = inlined_call_operand.vmem [shape: f32[1,12], index: 3, kind: input, shape index: {}]
  %s4 = inlined_call_operand.vmem [shape: f32[100,5], index: 4, kind: input, shape index: {}]
  %s5 = inlined_call_operand.vmem [shape: f32[100,5], index: 5, kind: input, shape index: {}]
  %s6 = inlined_call_operand.hbm [shape: f32[2,5], index: 6, kind: output, shape index: {}]
  %s7 = sld [smem:[#allocation0]]
  $region38: #{tpu_custom_call.1} parent=0
    _
  %s9 = ssub.s32 1, %s7
  %s10 = scalar_select 0, %s9, %s7
  $region1: #{tpu_custom_call.1} parent=0
    #allocation2 [shape = 'u8[512]{0}', space=smem, size = 0x200, scoped, tag = 'input window, operand 0, single buffered']
    #allocation3 [shape = 's32[1]{0}', space=sflag, size = 0x4, scoped, tag = 'scoped memory for tpu_custom_call.1']
    #allocation4 [shape = 's32[1]{0}', space=sflag, size = 0x4, scoped, tag = 'scoped memory for tpu_custom_call.1']
    #allocation5 [shape = 'u8[1024]{0}', space=vmem, size = 0x400, scoped, tag = 'output window, operand 0, single buffered']
    %11 = vsyncpa [#allocation4], 0
    %12 = vsyncpa [#allocation3], 0
    // Predicated region
    $region2: #{tpu_custom_call.1} parent=1 // pred_check
      _
    $region3: #{tpu_custom_call.1} parent=1 // pred_check_branch
      %14 = sbr.rel (0) target = $region5
    $region4: #{tpu_custom_call.1} parent=1 // pred_region
      %s16 = ssub.s32 16, 16
      %17 = vsyncadd [#allocation4], %s16
      %s19 = sshll.u32 %s0, 4
      %s20 = int_to_ptr.vmem [resolvable:$true] %s19
      %22 = dma.vmem_to_smem %s20, 16, [#allocation2], [#allocation4]
    $region5: #{tpu_custom_call.1} parent=1 // pred_fallthru
      _
    // Predicated region
    $region6: #{tpu_custom_call.1} parent=1 // pred_check
      _
    $region7: #{tpu_custom_call.1} parent=1 // pred_check_branch
      %24 = sbr.rel (0) target = $region9
    $region8: #{tpu_custom_call.1} parent=1 // pred_region
      _
    $region9: #{tpu_custom_call.1} parent=1 // pred_fallthru
      _
    // Predicated region
    $region10: #{tpu_custom_call.1} parent=1 // pred_check
      _
    $region11: #{tpu_custom_call.1} parent=1 // pred_check_branch
      %26 = sbr.rel (0) target = $region13
    $region12: #{tpu_custom_call.1} parent=1 // pred_region
      _
    $region13: #{tpu_custom_call.1} parent=1 // pred_fallthru
      _
    // Predicated region
    $region14: #{tpu_custom_call.1} parent=1 // pred_check
      _
    $region15: #{tpu_custom_call.1} parent=1 // pred_check_branch
      %28 = sbr.rel (0) target = $region17
    $region16: #{tpu_custom_call.1} parent=1 // pred_region
      _
    $region17: #{tpu_custom_call.1} parent=1 // pred_fallthru
      _
    // Predicated region
    $region18: #{tpu_custom_call.1} parent=1 // pred_check
      _
    $region19: #{tpu_custom_call.1} parent=1 // pred_check_branch
      %30 = sbr.rel (0) target = $region21
    $region20: #{tpu_custom_call.1} parent=1 // pred_region
      _
    $region21: #{tpu_custom_call.1} parent=1 // pred_fallthru
      _
    // Predicated region
    $region22: #{tpu_custom_call.1} parent=1 // pred_check
      _
    $region23: #{tpu_custom_call.1} parent=1 // pred_check_branch
      %32 = sbr.rel (0) target = $region25
    $region24: #{tpu_custom_call.1} parent=1 // pred_region
      _
    $region25: #{tpu_custom_call.1} parent=1 // pred_fallthru
      _
    // Predicated region
    $region26: #{tpu_custom_call.1} parent=1 // pred_check
      _
    $region27: #{tpu_custom_call.1} parent=1 // pred_check_branch
      %34 = sbr.rel (0) target = $region29
    $region28: #{tpu_custom_call.1} parent=1 // pred_region
      %35 = dma.done [#allocation4], 16
    $region29: #{tpu_custom_call.1} parent=1 // pred_fallthru
      _
    %36 = sfence
    %v37 = vld [vmem:[%s1] sm:$0x3]
    %v38 = vld [vmem:[%s2] sm:$0x3]
    %v39 = vld [vmem:[%s3] sm:$0x1]
    %s40 = sld [smem:[#allocation2 + $0x1]]
    %v42 = vlaneseq
    %v43 = vshrl.u32 %v42, 7
    %v44 = vsub.s32 0, %v43
    %v45 = vrot.slane %v39, %v44
    %v47 = vmul.f32 %v37, %v45
    %vm48 = vcmask 91136
    %v49 = vsel %vm48, %v47, 0.0
    %50 = vadd.xlane.f32.xlu0 %v49
    %v51 = vpop.xlane.xlu0 %50
    %v52 = vld [vmem:[%s5] sm:$0xff]
    %v53 = vld [vmem:[%s5 + $0x8] sm:$0xff]
    %v54 = vld [vmem:[%s5 + $0x10] sm:$0xff]
    %v55 = vld [vmem:[%s5 + $0x18] sm:$0xff]
    %v56 = vld [vmem:[%s5 + $0x20] sm:$0xff]
    %v57 = vld [vmem:[%s5 + $0x28] sm:$0xff]
    %v58 = vld [vmem:[%s5 + $0x30] sm:$0xff]
    %v59 = vld [vmem:[%s5 + $0x38] sm:$0xff]
    %v60 = vld [vmem:[%s5 + $0x40] sm:$0xff]
    %v61 = vld [vmem:[%s5 + $0x48] sm:$0xff]
    %v62 = vld [vmem:[%s5 + $0x50] sm:$0xff]
    %v63 = vld [vmem:[%s5 + $0x58] sm:$0xff]
    %v64 = vld [vmem:[%s5 + $0x60] sm:$0xf]
    %vm65 = vcmask 818176
    %v67 = vsel %vm65, %v38, 0
    %vm69 = vcmask 1043456
    %v71 = vsel %vm69, %v64, 0
    %73 = vmatprep.subr.mxu0 0.0
    %74 = vmatpush1.msra.mxu0 %v52
    %75 = vmatprep.subr.mxu0 0.0
    %76 = vmatpush1.msra.mxu0 %v53
    %77 = vmatprep.subr.mxu0 0.0
    %78 = vmatpush1.msra.mxu0 %v54
    %79 = vmatprep.subr.mxu0 0.0
    %80 = vmatpush1.msra.mxu0 %v55
    %81 = vmatprep.subr.mxu0 0.0
    %82 = vmatpush1.msra.mxu0 %v56
    %83 = vmatprep.subr.mxu0 0.0
    %84 = vmatpush1.msra.mxu0 %v57
    %85 = vmatprep.subr.mxu0 0.0
    %86 = vmatpush1.msra.mxu0 %v58
    %87 = vmatprep.subr.mxu0 0.0
    %88 = vmatpush1.msra.mxu0 %v59
    %89 = vmatprep.subr.mxu0 0.0
    %90 = vmatpush1.msra.mxu0 %v60
    %91 = vmatprep.subr.mxu0 0.0
    %92 = vmatpush1.msra.mxu0 %v61
    %93 = vmatprep.subr.mxu0 0.0
    %94 = vmatpush1.msra.mxu0 %v62
    %95 = vmatprep.subr.mxu0 0.0
    %96 = vmatpush1.msra.mxu0 %v63
    %97 = vmatprep.subr.mxu0 0.0
    %98 = vmatpush1.msra.mxu0 %v71
    %99 = vmatprep.subr.mxu0 0.0
    %100 = vmatpush1.msra.mxu0 0.0
    %101 = vmatprep.subr.mxu0 0.0
    %102 = vmatpush1.msra.mxu0 0.0
    %103 = vmatprep.subr.mxu0 0.0
    %104 = vmatpush1.msra.mxu0 0.0
    %105 = vmatprep.subr.mxu0 0.0
    %106 = vmatpush1.msra.mxu0 0.0
    %107 = vmatprep.subr.mxu0 0.0
    %108 = vmatpush1.msra.mxu0 0.0
    %109 = vmatprep.subr.mxu0 0.0
    %110 = vmatpush1.msra.mxu0 0.0
    %111 = vmatprep.subr.mxu0 0.0
    %112 = vmatpush1.msra.mxu0 0.0
    %113 = vmatprep.subr.mxu0 0.0
    %114 = vmatpush1.msra.mxu0 0.0
    %115 = vmatprep.subr.mxu0 0.0
    %116 = vmatpush1.msra.mxu0 0.0
    %117 = vmatprep.subr.mxu0 0.0
    %118 = vmatpush1.msra.mxu0 0.0
    %119 = vmatprep.subr.mxu0 0.0
    %120 = vmatpush1.msra.mxu0 0.0
    %121 = vmatprep.subr.mxu0 0.0
    %122 = vmatpush1.msra.mxu0 0.0
    %123 = vmatprep.subr.mxu0 0.0
    %124 = vmatpush1.msra.mxu0 0.0
    %125 = vmatprep.subr.mxu0 0.0
    %126 = vmatpush1.msra.mxu0 0.0
    %127 = vmatprep.subr.mxu0 0.0
    %128 = vmatpush1.msra.mxu0 0.0
    %129 = vmatprep.subr.mxu0 0.0
    %130 = vmatpush1.msra.mxu0 0.0
    %131 = vmatprep.subr.mxu0 0.0
    %132 = vmatpush1.msra.mxu0 0.0
    %133 = vmatprep.subr.mxu0 0.0
    %134 = vmatpush1.msra.mxu0 0.0
    %135 = vmatprep.subr.mxu0 0.0
    %136 = vmatpush1.msra.mxu0 0.0
    %137 = vmatprep.mubr.f32.mxu0 0.0
    %138 = vmatmul.mubr.f32.gmra.mrb[0].mxu0 %v67
    %v139 = vpop.f32.mrb[0].mxu0
    %v140 = vadd.f32 0.0, %v139
    %v141 = vpop.f32.mrb[0].mxu0
    %142 = vdwg.mxu0
    %s143 = sld [smem:[#allocation2]]
    %v144 = vld [vmem:[%s4] sm:$0xff]
    %v145 = vld [vmem:[%s4 + $0x8] sm:$0xff]
    %v146 = vld [vmem:[%s4 + $0x10] sm:$0xff]
    %v147 = vld [vmem:[%s4 + $0x18] sm:$0xff]
    %v148 = vld [vmem:[%s4 + $0x20] sm:$0xff]
    %v149 = vld [vmem:[%s4 + $0x28] sm:$0xff]
    %v150 = vld [vmem:[%s4 + $0x30] sm:$0xff]
    %v151 = vld [vmem:[%s4 + $0x38] sm:$0xff]
    %v152 = vld [vmem:[%s4 + $0x40] sm:$0xff]
    %v153 = vld [vmem:[%s4 + $0x48] sm:$0xff]
    %v154 = vld [vmem:[%s4 + $0x50] sm:$0xff]
    %v155 = vld [vmem:[%s4 + $0x58] sm:$0xff]
    %v156 = vld [vmem:[%s4 + $0x60] sm:$0xf]
    %v157 = vsel %vm48, %v37, 0.0
    %158 = vadd.xlane.f32.xlu0 %v157
    %v159 = vpop.xlane.xlu0 %158
    %v160 = vmul.f32 %v37, %v37
    %v161 = vsel %vm48, %v160, 0.0
    %162 = vadd.xlane.f32.xlu0 %v161
    %v163 = vpop.xlane.xlu0 %162
    %v165 = vsel %vm69, %v156, 0
    %167 = vmatprep.subr.mxu0 0.0
    %168 = vmatpush1.msra.mxu0 %v144
    %169 = vmatprep.subr.mxu0 0.0
    %170 = vmatpush1.msra.mxu0 %v145
    %171 = vmatprep.subr.mxu0 0.0
    %172 = vmatpush1.msra.mxu0 %v146
    %173 = vmatprep.subr.mxu0 0.0
    %174 = vmatpush1.msra.mxu0 %v147
    %175 = vmatprep.subr.mxu0 0.0
    %176 = vmatpush1.msra.mxu0 %v148
    %177 = vmatprep.subr.mxu0 0.0
    %178 = vmatpush1.msra.mxu0 %v149
    %179 = vmatprep.subr.mxu0 0.0
    %180 = vmatpush1.msra.mxu0 %v150
    %181 = vmatprep.subr.mxu0 0.0
    %182 = vmatpush1.msra.mxu0 %v151
    %183 = vmatprep.subr.mxu0 0.0
    %184 = vmatpush1.msra.mxu0 %v152
    %185 = vmatprep.subr.mxu0 0.0
    %186 = vmatpush1.msra.mxu0 %v153
    %187 = vmatprep.subr.mxu0 0.0
    %188 = vmatpush1.msra.mxu0 %v154
    %189 = vmatprep.subr.mxu0 0.0
    %190 = vmatpush1.msra.mxu0 %v155
    %191 = vmatprep.subr.mxu0 0.0
    %192 = vmatpush1.msra.mxu0 %v165
    %193 = vmatprep.subr.mxu0 0.0
    %194 = vmatpush1.msra.mxu0 0.0
    %195 = vmatprep.subr.mxu0 0.0
    %196 = vmatpush1.msra.mxu0 0.0
    %197 = vmatprep.subr.mxu0 0.0
    %198 = vmatpush1.msra.mxu0 0.0
    %199 = vmatprep.subr.mxu0 0.0
    %200 = vmatpush1.msra.mxu0 0.0
    %201 = vmatprep.subr.mxu0 0.0
    %202 = vmatpush1.msra.mxu0 0.0
    %203 = vmatprep.subr.mxu0 0.0
    %204 = vmatpush1.msra.mxu0 0.0
    %205 = vmatprep.subr.mxu0 0.0
    %206 = vmatpush1.msra.mxu0 0.0
    %207 = vmatprep.subr.mxu0 0.0
    %208 = vmatpush1.msra.mxu0 0.0
    %209 = vmatprep.subr.mxu0 0.0
    %210 = vmatpush1.msra.mxu0 0.0
    %211 = vmatprep.subr.mxu0 0.0
    %212 = vmatpush1.msra.mxu0 0.0
    %213 = vmatprep.subr.mxu0 0.0
    %214 = vmatpush1.msra.mxu0 0.0
    %215 = vmatprep.subr.mxu0 0.0
    %216 = vmatpush1.msra.mxu0 0.0
    %217 = vmatprep.subr.mxu0 0.0
    %218 = vmatpush1.msra.mxu0 0.0
    %219 = vmatprep.subr.mxu0 0.0
    %220 = vmatpush1.msra.mxu0 0.0
    %221 = vmatprep.subr.mxu0 0.0
    %222 = vmatpush1.msra.mxu0 0.0
    %223 = vmatprep.subr.mxu0 0.0
    %224 = vmatpush1.msra.mxu0 0.0
    %225 = vmatprep.subr.mxu0 0.0
    %226 = vmatpush1.msra.mxu0 0.0
    %227 = vmatprep.subr.mxu0 0.0
    %228 = vmatpush1.msra.mxu0 0.0
    %229 = vmatprep.subr.mxu0 0.0
    %230 = vmatpush1.msra.mxu0 0.0
    %231 = vmatprep.mubr.f32.mxu0 0.0
    %232 = vmatmul.mubr.f32.gmra.mrb[0].mxu0 %v67
    %v233 = vpop.f32.mrb[0].mxu0
    %v234 = vadd.f32 0.0, %v233
    %v235 = vpop.f32.mrb[0].mxu0
    %236 = vdwg.mxu0
    %v237 = vmul.f32 %v38, %v38
    %v239 = vsel %vm65, %v237, 0
    %241 = vmatprep.subr.mxu0 0.0
    %242 = vmatpush1.msra.mxu0 %v144
    %243 = vmatprep.subr.mxu0 0.0
    %244 = vmatpush1.msra.mxu0 %v145
    %245 = vmatprep.subr.mxu0 0.0
    %246 = vmatpush1.msra.mxu0 %v146
    %247 = vmatprep.subr.mxu0 0.0
    %248 = vmatpush1.msra.mxu0 %v147
    %249 = vmatprep.subr.mxu0 0.0
    %250 = vmatpush1.msra.mxu0 %v148
    %251 = vmatprep.subr.mxu0 0.0
    %252 = vmatpush1.msra.mxu0 %v149
    %253 = vmatprep.subr.mxu0 0.0
    %254 = vmatpush1.msra.mxu0 %v150
    %255 = vmatprep.subr.mxu0 0.0
    %256 = vmatpush1.msra.mxu0 %v151
    %257 = vmatprep.subr.mxu0 0.0
    %258 = vmatpush1.msra.mxu0 %v152
    %259 = vmatprep.subr.mxu0 0.0
    %260 = vmatpush1.msra.mxu0 %v153
    %261 = vmatprep.subr.mxu0 0.0
    %262 = vmatpush1.msra.mxu0 %v154
    %263 = vmatprep.subr.mxu0 0.0
    %264 = vmatpush1.msra.mxu0 %v155
    %265 = vmatprep.subr.mxu0 0.0
    %266 = vmatpush1.msra.mxu0 %v165
    %267 = vmatprep.subr.mxu0 0.0
    %268 = vmatpush1.msra.mxu0 0.0
    %269 = vmatprep.subr.mxu0 0.0
    %270 = vmatpush1.msra.mxu0 0.0
    %271 = vmatprep.subr.mxu0 0.0
    %272 = vmatpush1.msra.mxu0 0.0
    %273 = vmatprep.subr.mxu0 0.0
    %274 = vmatpush1.msra.mxu0 0.0
    %275 = vmatprep.subr.mxu0 0.0
    %276 = vmatpush1.msra.mxu0 0.0
    %277 = vmatprep.subr.mxu0 0.0
    %278 = vmatpush1.msra.mxu0 0.0
    %279 = vmatprep.subr.mxu0 0.0
    %280 = vmatpush1.msra.mxu0 0.0
    %281 = vmatprep.subr.mxu0 0.0
    %282 = vmatpush1.msra.mxu0 0.0
    %283 = vmatprep.subr.mxu0 0.0
    %284 = vmatpush1.msra.mxu0 0.0
    %285 = vmatprep.subr.mxu0 0.0
    %286 = vmatpush1.msra.mxu0 0.0
    %287 = vmatprep.subr.mxu0 0.0
    %288 = vmatpush1.msra.mxu0 0.0
    %289 = vmatprep.subr.mxu0 0.0
    %290 = vmatpush1.msra.mxu0 0.0
    %291 = vmatprep.subr.mxu0 0.0
    %292 = vmatpush1.msra.mxu0 0.0
    %293 = vmatprep.subr.mxu0 0.0
    %294 = vmatpush1.msra.mxu0 0.0
    %295 = vmatprep.subr.mxu0 0.0
    %296 = vmatpush1.msra.mxu0 0.0
    %297 = vmatprep.subr.mxu0 0.0
    %298 = vmatpush1.msra.mxu0 0.0
    %299 = vmatprep.subr.mxu0 0.0
    %300 = vmatpush1.msra.mxu0 0.0
    %301 = vmatprep.subr.mxu0 0.0
    %302 = vmatpush1.msra.mxu0 0.0
    %303 = vmatprep.subr.mxu0 0.0
    %304 = vmatpush1.msra.mxu0 0.0
    %305 = vmatprep.mubr.f32.mxu0 0.0
    %306 = vmatmul.mubr.f32.gmra.mrb[0].mxu0 %v239
    %v307 = vpop.f32.mrb[0].mxu0
    %v308 = vadd.f32 0.0, %v307
    %v309 = vpop.f32.mrb[0].mxu0
    %310 = vdwg.mxu0
    %v311 = vadd.f32 %v159, %v234
    %v312 = vmul.f32 %v311, 0.03125
    %v313 = vadd.f32 %v163, %v308
    %v314 = vmul.f32 %v313, 0.03125
    %v315 = vmul.f32 %v312, %v312
    %v316 = vsub.f32 %v314, %v315
    %v317 = vmax.f32 %v316, 0.0
    %v318 = vadd.f32 %v317, 1e-05
    %v319 = vrsqrt.pop %v318
    %v320 = vadd.f32 %v51, %v140
    %v321 = vstv %s143
    %v322 = vmul.f32 %v312, %v321
    %v323 = vsub.f32 %v320, %v322
    %v324 = vmul.f32 %v319, %v323
    %v325 = vstv %s40
    %v326 = vadd.f32 %v324, %v325
    %vm327 = vcmask 33792
    %328 = vst.msk [vmem:[#allocation5] sm:$0x3] %vm327, %v326
    // Predicated region
    $region30: #{tpu_custom_call.1} parent=1 // pred_check
      _
    $region31: #{tpu_custom_call.1} parent=1 // pred_check_branch
      %330 = sbr.rel (0) target = $region33
    $region32: #{tpu_custom_call.1} parent=1 // pred_region
      %s332 = ssub.s32 32, 32
      %333 = vsyncadd [#allocation3], %s332
      %s335 = sshll.u32 [#allocation5], 4
      %s336 = int_to_ptr.vmem [resolvable:$true] %s335
      %338 = dma.vmem_to_hbm [thread:$0]  %s336, 32, %s6, [#allocation3]
    $region33: #{tpu_custom_call.1} parent=1 // pred_fallthru
      _
    // Predicated region
    $region34: #{tpu_custom_call.1} parent=1 // pred_check
      _
    $region35: #{tpu_custom_call.1} parent=1 // pred_check_branch
      %340 = sbr.rel (0) target = $region37
    $region36: #{tpu_custom_call.1} parent=1 // pred_region
      %341 = dma.done [#allocation3], 32
    $region37: #{tpu_custom_call.1} parent=1 // pred_fallthru
      _
    %342 = vsyncpa [#allocation3], 1
    %343 = vsyncpa [#allocation4], 1

</llo_original>
